<compile_context>
chip_gen: v7x
topology: tpu7x:2x2x1
jax: 0.10.0
libtpu: 0.0.40
codegen_flags: <defaults>
</compile_context>

<pallas_src>
import functools
import math

import numpy as np

import jax
import jax.numpy as jnp
from jax.experimental import pallas as pl
from jax.experimental.pallas import tpu as pltpu


# ---------------------------------------------------------------------------
# Pallas kernel
# ---------------------------------------------------------------------------

def _segm_postprocess_kernel(m_ref, wy_ref, wxT_ref, sy_ref, sxT_ref, o_ref,
                             *, thr_logit):
    """Fused bilinear-resize + threshold + crop + nearest-resize for tq queries.

    m_ref   : [tq, H, W]       f32   mask logits
    wy_ref  : [max_h, H]       f32   bilinear row weights
    wxT_ref : [W, max_w]       f32   bilinear col weights (transposed)
    sy_ref  : [oh, max_h]      bf16  one-hot nearest row selection (crop folded in)
    sxT_ref : [max_w, ow]      bf16  one-hot nearest col selection (transposed)
    o_ref   : [tq, oh, ow]     f32   binarized masks (0.0 / 1.0)
    """
    tq = m_ref.shape[0]
    wy = wy_ref[...]
    wxT = wxT_ref[...]
    sy = sy_ref[...]
    sxT = sxT_ref[...]

    def body(q, carry):
        x = m_ref[q]                                                    # [H, W]
        # bilinear resize to (max_h, max_w) via two matmuls (f32 for accuracy
        # near the decision boundary)
        t = jnp.dot(wy, x, preferred_element_type=jnp.float32)         # [max_h, W]
        t = jnp.dot(t, wxT, preferred_element_type=jnp.float32)        # [max_h, max_w]
        # sigmoid(t) > threshold  <=>  t > logit(threshold)
        b = jnp.where(t > thr_logit, 1.0, 0.0).astype(jnp.bfloat16)    # exact {0,1}
        # crop + nearest resize as one-hot selection matmuls (bf16, exact)
        r = jnp.dot(sy, b, preferred_element_type=jnp.float32)         # [oh, max_w]
        r = jnp.dot(r.astype(jnp.bfloat16), sxT,
                    preferred_element_type=jnp.float32)                 # [oh, ow]
        o_ref[q] = r.astype(o_ref.dtype)
        return carry

    jax.lax.fori_loop(0, tq, body, 0)


def _run_postprocess_kernel(m, wy, wxT, sy, sxT, thr_logit, tq):
    """m: [Q, H, W] f32  ->  [Q, oh, ow] f32 (0/1)."""
    Q, H, W = m.shape
    max_h = wy.shape[0]
    max_w = wxT.shape[1]
    oh = sy.shape[0]
    ow = sxT.shape[1]
    kern = functools.partial(_segm_postprocess_kernel, thr_logit=thr_logit)
    return pl.pallas_call(
        kern,
        out_shape=jax.ShapeDtypeStruct((Q, oh, ow), jnp.float32),
        grid=(Q // tq,),
        in_specs=[
            pl.BlockSpec((tq, H, W), lambda qi: (qi, 0, 0)),
            pl.BlockSpec((max_h, H), lambda qi: (0, 0)),
            pl.BlockSpec((W, max_w), lambda qi: (0, 0)),
            pl.BlockSpec((oh, max_h), lambda qi: (0, 0)),
            pl.BlockSpec((max_w, ow), lambda qi: (0, 0)),
        ],
        out_specs=pl.BlockSpec((tq, oh, ow), lambda qi: (qi, 0, 0)),
        compiler_params=pltpu.CompilerParams(
            dimension_semantics=("parallel",)),   # v7x: shard queries across 2 TCs
    )(m, wy, wxT, sy, sxT)


# ---------------------------------------------------------------------------
# Interpolation-matrix builders (host/trace-time glue, tiny)
# ---------------------------------------------------------------------------

def _bilinear_matrix(out_size, in_size, dtype=jnp.float32):
    """F.interpolate(mode='bilinear', align_corners=False) 1-D weights: [out, in]."""
    dst = jnp.arange(out_size, dtype=jnp.float32)
    src = (dst + 0.5) * (float(in_size) / float(out_size)) - 0.5
    src = jnp.maximum(src, 0.0)                        # PyTorch clamps negatives to 0
    x0f = jnp.floor(src)
    frac = src - x0f
    x0 = jnp.clip(x0f.astype(jnp.int32), 0, in_size - 1)
    x1 = jnp.minimum(x0 + 1, in_size - 1)
    cols = jnp.arange(in_size)
    w0 = (cols[None, :] == x0[:, None]).astype(jnp.float32) * (1.0 - frac)[:, None]
    w1 = (cols[None, :] == x1[:, None]).astype(jnp.float32) * frac[:, None]
    return (w0 + w1).astype(dtype)


def _nearest_matrix(out_size, in_cropped, in_full, dtype=jnp.float32):
    """F.interpolate(mode='nearest') on the cropped [:in_cropped] prefix, as a
    one-hot selection over the full (uncropped) axis: [out, in_full]."""
    dst = jnp.arange(out_size)
    src = (dst * in_cropped) // out_size               # floor(dst * in / out) < in_cropped
    cols = jnp.arange(in_full)
    return (cols[None, :] == src[:, None]).astype(dtype)


def _logit(threshold):
    t = min(max(float(threshold), 1e-7), 1.0 - 1e-7)
    return float(math.log(t / (1.0 - t)))


def _pick_query_tile(q, cap=4):
    for d in range(min(cap, q), 0, -1):
        if q % d == 0:
            return d
    return 1


# ---------------------------------------------------------------------------
# Module forward
# ---------------------------------------------------------------------------

def post_process_segm(results, outputs, orig_target_sizes, max_target_sizes,
                      threshold=0.5):
    """JAX/Pallas equivalent of PostProcessSegm.forward.

    outputs['pred_masks'] : [B, Q, 1, H, W] (or [B, Q, H, W]) mask logits (jnp array)
    orig_target_sizes / max_target_sizes : host int arrays [B, 2]
    results               : list of B dicts; results[i]['masks'] is set to a uint8
                            array [Q, 1, oh_i, ow_i]  (kept on device; .cpu() is the
                            caller's concern).
    """
    mts = np.asarray(max_target_sizes)
    ots = np.asarray(orig_target_sizes)
    assert len(ots) == len(mts)
    max_h = int(mts[:, 0].max())
    max_w = int(mts[:, 1].max())

    masks = outputs["pred_masks"]
    if masks.ndim == 5 and masks.shape[2] == 1:        # .squeeze(2)
        masks = jnp.squeeze(masks, axis=2)
    B, Q, H, W = masks.shape

    wy = _bilinear_matrix(max_h, H)                    # [max_h, H]  f32
    wxT = _bilinear_matrix(max_w, W).T                 # [W, max_w]  f32
    thr_logit = _logit(threshold)
    tq = _pick_query_tile(Q)

    for i in range(B):
        img_h, img_w = int(mts[i, 0]), int(mts[i, 1])
        oh, ow = int(ots[i, 0]), int(ots[i, 1])
        sy = _nearest_matrix(oh, img_h, max_h, jnp.bfloat16)       # [oh, max_h]
        sxT = _nearest_matrix(ow, img_w, max_w, jnp.bfloat16).T    # [max_w, ow]
        out = _run_postprocess_kernel(masks[i], wy, wxT, sy, sxT, thr_logit, tq)
        results[i]["masks"] = out.astype(jnp.uint8)[:, None, :, :]  # [Q,1,oh,ow] .byte()
    return results


class PostProcessSegm:
    def __init__(self, threshold=0.5):
        self.threshold = threshold

    def __call__(self, results, outputs, orig_target_sizes, max_target_sizes):
        return post_process_segm(results, outputs, orig_target_sizes,
                                 max_target_sizes, self.threshold)


# ---------------------------------------------------------------------------
# Demo
# ---------------------------------------------------------------------------

if __name__ == "__main__":
    key = jax.random.PRNGKey(0)
    B, Q, H, W = 2, 8, 16, 16
    pred_masks = 2.0 * jax.random.normal(key, (B, Q, 1, H, W), jnp.float32)
    max_target_sizes = np.array([[48, 40], [40, 48]], dtype=np.int32)   # padded sizes
    orig_target_sizes = np.array([[56, 44], [36, 52]], dtype=np.int32)  # original sizes

    results = [dict() for _ in range(B)]
    outputs = {"pred_masks": pred_masks}
    postproc = PostProcessSegm(threshold=0.5)
    results = postproc(results, outputs, orig_target_sizes, max_target_sizes)

    # ------- validation against a NumPy float64 reference of the same math -------
    masks_np = np.asarray(jnp.squeeze(pred_masks, axis=2)).astype(np.float64)
    max_h = int(max_target_sizes[:, 0].max())
    max_w = int(max_target_sizes[:, 1].max())
    wy_np = np.asarray(_bilinear_matrix(max_h, H)).astype(np.float64)
    wxT_np = np.asarray(_bilinear_matrix(max_w, W)).astype(np.float64).T
    thr_logit = _logit(0.5)

    for i in range(B):
        got = jax.block_until_ready(results[i]["masks"])
        oh, ow = int(orig_target_sizes[i, 0]), int(orig_target_sizes[i, 1])
        img_h, img_w = int(max_target_sizes[i, 0]), int(max_target_sizes[i, 1])
        assert got.shape == (Q, 1, oh, ow), got.shape
        assert got.dtype == jnp.uint8
        got_np = np.asarray(got)[:, 0]
        assert set(np.unique(got_np)).issubset({0, 1})

        sy_np = np.asarray(_nearest_matrix(oh, img_h, max_h)).astype(np.float64)
        sxT_np = np.asarray(_nearest_matrix(ow, img_w, max_w)).astype(np.float64).T
        t = np.einsum("ah,qhw,wb->qab", wy_np, masks_np[i], wxT_np)
        ref_bin = (t > thr_logit).astype(np.float64)
        ref = (np.einsum("ya,qab,bx->qyx", sy_np, ref_bin, sxT_np) > 0.5).astype(np.uint8)
        # ignore pixels whose source logit is within rounding distance of the threshold
        safe = np.einsum("ya,qab,bx->qyx", sy_np,
                         (np.abs(t - thr_logit) > 1e-4).astype(np.float64),
                         sxT_np) > 0.5
        assert np.array_equal(got_np[safe], ref[safe])

    print("KERNEL_OK")
</pallas_src>

<mosaic_0001>
module attributes {stable_mosaic.version = 11 : i64} {
  func.func @_segm_postprocess_kernel(%arg0: i32, %arg1: memref<4x16x16xf32, #tpu.memory_space<vmem>>, %arg2: memref<48x16xf32, #tpu.memory_space<vmem>>, %arg3: memref<16x48xf32, #tpu.memory_space<vmem>>, %arg4: memref<56x48xbf16, #tpu.memory_space<vmem>>, %arg5: memref<48x44xbf16, #tpu.memory_space<vmem>>, %arg6: memref<4x56x44xf32, #tpu.memory_space<vmem>>) attributes {dimension_semantics = [#tpu.dimension_semantics<parallel>], iteration_bounds = array<i64: 2>, scalar_prefetch = 0 : i64, scratch_operands = 0 : i64, tpu.core_type = #tpu.core_type<tc>, window_params = [{transform_indices = @transform_0, window_bounds = array<i64: 4, 16, 16>}, {pipeline_mode = #tpu.pipeline_mode<synchronous>, transform_indices = @transform_1, window_bounds = array<i64: 48, 16>}, {pipeline_mode = #tpu.pipeline_mode<synchronous>, transform_indices = @transform_2, window_bounds = array<i64: 16, 48>}, {pipeline_mode = #tpu.pipeline_mode<synchronous>, transform_indices = @transform_3, window_bounds = array<i64: 56, 48>}, {pipeline_mode = #tpu.pipeline_mode<synchronous>, transform_indices = @transform_4, window_bounds = array<i64: 48, 44>}, {transform_indices = @transform_5, window_bounds = array<i64: 4, 56, 44>}]} {
    %c0 = arith.constant 0 : index
    %c0_0 = arith.constant 0 : index
    %0 = vector.load %arg2[%c0, %c0_0] : memref<48x16xf32, #tpu.memory_space<vmem>>, vector<48x16xf32>
    %c0_1 = arith.constant 0 : index
    %c0_2 = arith.constant 0 : index
    %1 = vector.load %arg3[%c0_1, %c0_2] : memref<16x48xf32, #tpu.memory_space<vmem>>, vector<16x48xf32>
    %c0_3 = arith.constant 0 : index
    %c0_4 = arith.constant 0 : index
    %2 = vector.load %arg4[%c0_3, %c0_4] : memref<56x48xbf16, #tpu.memory_space<vmem>>, vector<56x48xbf16>
    %c0_5 = arith.constant 0 : index
    %c0_6 = arith.constant 0 : index
    %3 = vector.load %arg5[%c0_5, %c0_6] : memref<48x44xbf16, #tpu.memory_space<vmem>>, vector<48x44xbf16>
    %c0_i32 = arith.constant 0 : i32
    %c4_i32 = arith.constant 4 : i32
    %4 = arith.addi %c0_i32, %c4_i32 : i32
    %c1_i32 = arith.constant 1 : i32
    scf.for %arg7 = %c0_i32 to %4 step %c1_i32  : i32 {
      %5 = arith.index_cast %arg7 : i32 to index
      %c0_8 = arith.constant 0 : index
      %c0_9 = arith.constant 0 : index
      %6 = vector.load %arg1[%5, %c0_8, %c0_9] : memref<4x16x16xf32, #tpu.memory_space<vmem>>, vector<1x16x16xf32>
      %7 = vector.shape_cast %6 : vector<1x16x16xf32> to vector<16x16xf32>
      %cst = arith.constant dense<0.000000e+00> : vector<48x16xf32>
      %8 = tpu.matmul %0, %7, %cst {dimension_numbers = #tpu.dot_dimension_numbers<[1], [0], [0], [1], [0, 0, 1, 1], [], []>} : vector<48x16xf32>, vector<16x16xf32>, vector<48x16xf32> -> vector<48x16xf32>
      %cst_10 = arith.constant dense<0.000000e+00> : vector<48x48xf32>
      %9 = tpu.matmul %8, %1, %cst_10 {dimension_numbers = #tpu.dot_dimension_numbers<[1], [0], [0], [1], [0, 0, 1, 1], [], []>} : vector<48x16xf32>, vector<16x48xf32>, vector<48x48xf32> -> vector<48x48xf32>
      %cst_11 = arith.constant 0.000000e+00 : f32
      %10 = vector.broadcast %cst_11 : f32 to vector<48x48xf32>
      %11 = arith.cmpf ogt, %9, %10 : vector<48x48xf32>
      %cst_12 = arith.constant 1.000000e+00 : f32
      %cst_13 = arith.constant 0.000000e+00 : f32
      %12 = vector.broadcast %cst_12 : f32 to vector<48x48xf32>
      %13 = vector.broadcast %cst_13 : f32 to vector<48x48xf32>
      %14 = arith.select %11, %12, %13 : vector<48x48xi1>, vector<48x48xf32>
      %15 = arith.truncf %14 : vector<48x48xf32> to vector<48x48xbf16>
      %cst_14 = arith.constant dense<0.000000e+00> : vector<56x48xf32>
      %16 = tpu.matmul %2, %15, %cst_14 {dimension_numbers = #tpu.dot_dimension_numbers<[1], [0], [0], [1], [0, 0, 1, 1], [], []>} : vector<56x48xbf16>, vector<48x48xbf16>, vector<56x48xf32> -> vector<56x48xf32>
      %17 = arith.truncf %16 : vector<56x48xf32> to vector<56x48xbf16>
      %cst_15 = arith.constant dense<0.000000e+00> : vector<56x44xf32>
      %18 = tpu.matmul %17, %3, %cst_15 {dimension_numbers = #tpu.dot_dimension_numbers<[1], [0], [0], [1], [0, 0, 1, 1], [], []>} : vector<56x48xbf16>, vector<48x44xbf16>, vector<56x44xf32> -> vector<56x44xf32>
      %19 = arith.index_cast %arg7 : i32 to index
      %c0_16 = arith.constant 0 : index
      %c0_17 = arith.constant 0 : index
      %20 = vector.load %arg6[%19, %c0_16, %c0_17] : memref<4x56x44xf32, #tpu.memory_space<vmem>>, vector<1x56x44xf32>
      %21 = vector.shape_cast %20 : vector<1x56x44xf32> to vector<56x44xf32>
      %22 = vector.shape_cast %18 : vector<56x44xf32> to vector<1x56x44xf32>
      tpu.vector_store %arg6[%19, %c0_16, %c0_17], %22 {strides = array<i32>} : memref<4x56x44xf32, #tpu.memory_space<vmem>>, vector<1x56x44xf32>,
    }
    %c4_i32_7 = arith.constant 4 : i32
    return
  }
  func.func @transform_0(%arg0: i32) -> (i32, i32, i32) {
    %c0_i32 = arith.constant 0 : i32
    %c0_i32_0 = arith.constant 0 : i32
    %c0_i32_1 = arith.constant 0 : i32
    return %arg0, %c0_i32, %c0_i32_0 : i32, i32, i32
  }
  func.func @transform_1(%arg0: i32) -> (i32, i32) {
    %c0_i32 = arith.constant 0 : i32
    %c0_i32_0 = arith.constant 0 : i32
    %c0_i32_1 = arith.constant 0 : i32
    return %c0_i32, %c0_i32_0 : i32, i32
  }
  func.func @transform_2(%arg0: i32) -> (i32, i32) {
    %c0_i32 = arith.constant 0 : i32
    %c0_i32_0 = arith.constant 0 : i32
    %c0_i32_1 = arith.constant 0 : i32
    return %c0_i32, %c0_i32_0 : i32, i32
  }
  func.func @transform_3(%arg0: i32) -> (i32, i32) {
    %c0_i32 = arith.constant 0 : i32
    %c0_i32_0 = arith.constant 0 : i32
    %c0_i32_1 = arith.constant 0 : i32
    return %c0_i32, %c0_i32_0 : i32, i32
  }
  func.func @transform_4(%arg0: i32) -> (i32, i32) {
    %c0_i32 = arith.constant 0 : i32
    %c0_i32_0 = arith.constant 0 : i32
    %c0_i32_1 = arith.constant 0 : i32
    return %c0_i32, %c0_i32_0 : i32, i32
  }
  func.func @transform_5(%arg0: i32) -> (i32, i32, i32) {
    %c0_i32 = arith.constant 0 : i32
    %c0_i32_0 = arith.constant 0 : i32
    %c0_i32_1 = arith.constant 0 : i32
    return %arg0, %c0_i32, %c0_i32_0 : i32, i32, i32
  }
}

</mosaic_0001>

<llo_original>
// kernel: tpu_custom_call.1
$region0: #{tpu_custom_call.1}
  #allocation0 [shape = 'u32[]', space=smem, size = 0x4, offset = 0x4, fixed_abs, tag = 'smem constant byte address 0x4 - core index']
  #allocation1 [shape = 'u32[144,128]{1,0:T(1,128)}', space=vmem, size = 0x12000, scoped, tag = 'internal scratch']
  %s0 = inlined_call_operand.hbm [shape: f32[8,16,16], index: 0, kind: input, shape index: {}]
  %s1 = inlined_call_operand.vmem [shape: f32[48,16], index: 1, kind: input, shape index: {}]
  %s2 = inlined_call_operand.vmem [shape: f32[16,48], index: 2, kind: input, shape index: {}]
  %s3 = inlined_call_operand.vmem [shape: bf16[56,48], index: 3, kind: input, shape index: {}]
  %s4 = inlined_call_operand.vmem [shape: bf16[48,44], index: 4, kind: input, shape index: {}]
  %s5 = inlined_call_operand.vmem [shape: f32[8,56,44], index: 5, kind: output, shape index: {}]
  %s6 = sld [smem:[#allocation0]]
  $region64: #{tpu_custom_call.1} parent=0
    _
  %s8 = ssub.s32 1, %s6
  %s9 = scalar_select 0, %s8, %s6
  $region1: #{tpu_custom_call.1} parent=0
    #allocation2 [shape = 'u8[65536]{0}', space=vmem, size = 0x10000, scoped, tag = 'input window, operand 0']
    #allocation3 [shape = 's32[2]{0}', space=sflag, size = 0x8, scoped, tag = 'scoped memory for tpu_custom_call.1']
    %10 = vsyncpa [#allocation3], 0
    %s11 = scalar_lea.sflag [#allocation3], 1
    %12 = vsyncpa %s11, 0
    loop: start=0, step=1, limit=4
    $region2: #{tpu_custom_call.1} parent=1 // loop_pre_header
      _
    $region3: #{tpu_custom_call.1} parent=1 // loop_header
      %s14 = sphi 0, %s18
      %p15 = scmp.ge.s32.totalorder %s14, 4
      %s24 = sphi 0, %s26
      %s27 = sphi 0, %s24
      %s28 = sphi 0, %s27
      %s44 = sphi 0, %s28
      %s48 = sphi 0, %s48
      %s50 = sphi 0, %s48
      %s51 = sphi 0, %s50
      %s65 = sphi 0, %s51
      %s69 = sphi 0, %s69
      %s71 = sphi 0, %s69
      %s72 = sphi 0, %s71
      %s86 = sphi 0, %s72
      %s90 = sphi 0, %s90
      %s92 = sphi 0, %s90
      %s93 = sphi 0, %s92
      %s107 = sphi 0, %s93
      %s111 = sphi 0, %s111
      %s113 = sphi 0, %s111
      %s114 = sphi 0, %s113
      %s128 = sphi 0, %s114
      %s134 = sphi 0, %s136
      %s137 = sphi 0, %s134
      %s138 = sphi 0, %s137
      %s154 = sphi 0, %s138
    $region4: #{tpu_custom_call.1} parent=1 // loop_header_branch
      %17 = sbr.rel (%p15) target = $region8
    $region5: #{tpu_custom_call.1} parent=1 // loop_body
      %s19 = ssub.s32 %s14, 1
      %s20 = ssub.s32 %s14, 2
      %s21 = sadd.s32 %s14, 1
      %s22 = ssub.s32 %s14, %s21
      %p23 = scmp.eq.s32.totalorder %s22, 0
      %s25 = sadd.s32 %s24, 1
      %s26 = scalar_select %p23, %s24, %s25
      %p29 = pneg %p23
      %p30 = scmp.eq.s32.totalorder %s14, 1
      %p31 = por %p29, %p30
      %p32 = scmp.ne.s32.totalorder %s24, %s27
      %p33 = scmp.eq.s32.totalorder %s14, 0
      %p34 = por %p32, %p33
      %p35 = scmp.ne.s32.totalorder %s24, %s27
      %p36 = scmp.eq.s32.totalorder %s19, 1
      %p37 = por %p35, %p36
      %p38 = scmp.ne.s32.totalorder %s27, %s28
      %p39 = scmp.eq.s32.totalorder %s19, 0
      %p40 = por %p38, %p39
      %p41 = scmp.ne.s32.totalorder %s27, %s28
      %p42 = scmp.eq.s32.totalorder %s20, 1
      %p43 = por %p41, %p42
      %p45 = scmp.ne.s32.totalorder %s28, %s44
      %p46 = scmp.eq.s32.totalorder %s20, 0
      %p47 = por %p45, %p46
      %s49 = sadd.s32 %s48, 1
      %p52 = scmp.eq.s32.totalorder %s14, 1
      %p53 = scmp.ne.s32.totalorder %s48, %s50
      %p54 = scmp.eq.s32.totalorder %s14, 0
      %p55 = por %p53, %p54
      %p56 = scmp.ne.s32.totalorder %s48, %s50
      %p57 = scmp.eq.s32.totalorder %s19, 1
      %p58 = por %p56, %p57
      %p59 = scmp.ne.s32.totalorder %s50, %s51
      %p60 = scmp.eq.s32.totalorder %s19, 0
      %p61 = por %p59, %p60
      %p62 = scmp.ne.s32.totalorder %s50, %s51
      %p63 = scmp.eq.s32.totalorder %s20, 1
      %p64 = por %p62, %p63
      %p66 = scmp.ne.s32.totalorder %s51, %s65
      %p67 = scmp.eq.s32.totalorder %s20, 0
      %p68 = por %p66, %p67
      %s70 = sadd.s32 %s69, 1
      %p73 = scmp.eq.s32.totalorder %s14, 1
      %p74 = scmp.ne.s32.totalorder %s69, %s71
      %p75 = scmp.eq.s32.totalorder %s14, 0
      %p76 = por %p74, %p75
      %p77 = scmp.ne.s32.totalorder %s69, %s71
      %p78 = scmp.eq.s32.totalorder %s19, 1
      %p79 = por %p77, %p78
      %p80 = scmp.ne.s32.totalorder %s71, %s72
      %p81 = scmp.eq.s32.totalorder %s19, 0
      %p82 = por %p80, %p81
      %p83 = scmp.ne.s32.totalorder %s71, %s72
      %p84 = scmp.eq.s32.totalorder %s20, 1
      %p85 = por %p83, %p84
      %p87 = scmp.ne.s32.totalorder %s72, %s86
      %p88 = scmp.eq.s32.totalorder %s20, 0
      %p89 = por %p87, %p88
      %s91 = sadd.s32 %s90, 1
      %p94 = scmp.eq.s32.totalorder %s14, 1
      %p95 = scmp.ne.s32.totalorder %s90, %s92
      %p96 = scmp.eq.s32.totalorder %s14, 0
      %p97 = por %p95, %p96
      %p98 = scmp.ne.s32.totalorder %s90, %s92
      %p99 = scmp.eq.s32.totalorder %s19, 1
      %p100 = por %p98, %p99
      %p101 = scmp.ne.s32.totalorder %s92, %s93
      %p102 = scmp.eq.s32.totalorder %s19, 0
      %p103 = por %p101, %p102
      %p104 = scmp.ne.s32.totalorder %s92, %s93
      %p105 = scmp.eq.s32.totalorder %s20, 1
      %p106 = por %p104, %p105
      %p108 = scmp.ne.s32.totalorder %s93, %s107
      %p109 = scmp.eq.s32.totalorder %s20, 0
      %p110 = por %p108, %p109
      %s112 = sadd.s32 %s111, 1
      %p115 = scmp.eq.s32.totalorder %s14, 1
      %p116 = scmp.ne.s32.totalorder %s111, %s113
      %p117 = scmp.eq.s32.totalorder %s14, 0
      %p118 = por %p116, %p117
      %p119 = scmp.ne.s32.totalorder %s111, %s113
      %p120 = scmp.eq.s32.totalorder %s19, 1
      %p121 = por %p119, %p120
      %p122 = scmp.ne.s32.totalorder %s113, %s114
      %p123 = scmp.eq.s32.totalorder %s19, 0
      %p124 = por %p122, %p123
      %p125 = scmp.ne.s32.totalorder %s113, %s114
      %p126 = scmp.eq.s32.totalorder %s20, 1
      %p127 = por %p125, %p126
      %p129 = scmp.ne.s32.totalorder %s114, %s128
      %p130 = scmp.eq.s32.totalorder %s20, 0
      %p131 = por %p129, %p130
      %s132 = ssub.s32 %s14, %s21
      %p133 = scmp.eq.s32.totalorder %s132, 0
      %s135 = sadd.s32 %s134, 1
      %s136 = scalar_select %p133, %s134, %s135
      %p139 = pneg %p133
      %p140 = scmp.eq.s32.totalorder %s14, 1
      %p141 = por %p139, %p140
      %p142 = scmp.ne.s32.totalorder %s134, %s137
      %p143 = scmp.eq.s32.totalorder %s14, 0
      %p144 = por %p142, %p143
      %p145 = scmp.ne.s32.totalorder %s134, %s137
      %p146 = scmp.eq.s32.totalorder %s19, 1
      %p147 = por %p145, %p146
      %p148 = scmp.ne.s32.totalorder %s137, %s138
      %p149 = scmp.eq.s32.totalorder %s19, 0
      %p150 = por %p148, %p149
      %p151 = scmp.ne.s32.totalorder %s137, %s138
      %p152 = scmp.eq.s32.totalorder %s20, 1
      %p153 = por %p151, %p152
      %p155 = scmp.ne.s32.totalorder %s138, %s154
      %p156 = scmp.eq.s32.totalorder %s20, 0
      %p157 = por %p155, %p156
      %p158 = scmp.le.s32.totalorder 1, %s14
      %p159 = scmp.lt.s32.totalorder %s14, 3
      %p160 = pnand %p158, %p159
      %p161 = pneg %p160
      // Predicated region
      $region9: #{tpu_custom_call.1} parent=5 // pred_check
        _
      $region10: #{tpu_custom_call.1} parent=5 // pred_check_branch
        %163 = sbr.rel (%p160) target = $region12
      $region11: #{tpu_custom_call.1} parent=5 // pred_region
        %s164 = ssub.s32 %s14, 1
        // Predicated region
        $region13: #{tpu_custom_call.1} parent=11 // pred_check
          %p165 = pneg %p61
        $region14: #{tpu_custom_call.1} parent=11 // pred_check_branch
          %167 = sbr.rel (%p165) target = $region16
        $region15: #{tpu_custom_call.1} parent=11 // pred_region
          _
        $region16: #{tpu_custom_call.1} parent=11 // pred_fallthru
          _
        // Predicated region
        $region17: #{tpu_custom_call.1} parent=11 // pred_check
          %p168 = pneg %p82
        $region18: #{tpu_custom_call.1} parent=11 // pred_check_branch
          %170 = sbr.rel (%p168) target = $region20
        $region19: #{tpu_custom_call.1} parent=11 // pred_region
          _
        $region20: #{tpu_custom_call.1} parent=11 // pred_fallthru
          _
        // Predicated region
        $region21: #{tpu_custom_call.1} parent=11 // pred_check
          %p171 = pneg %p103
        $region22: #{tpu_custom_call.1} parent=11 // pred_check_branch
          %173 = sbr.rel (%p171) target = $region24
        $region23: #{tpu_custom_call.1} parent=11 // pred_region
          _
        $region24: #{tpu_custom_call.1} parent=11 // pred_fallthru
          _
        // Predicated region
        $region25: #{tpu_custom_call.1} parent=11 // pred_check
          %p174 = pneg %p124
        $region26: #{tpu_custom_call.1} parent=11 // pred_check_branch
          %176 = sbr.rel (%p174) target = $region28
        $region27: #{tpu_custom_call.1} parent=11 // pred_region
          _
        $region28: #{tpu_custom_call.1} parent=11 // pred_fallthru
          _
      $region12: #{tpu_custom_call.1} parent=5 // pred_fallthru
        _
      %p177 = scmp.lt.s32.totalorder %s14, 2
      // Predicated region
      $region29: #{tpu_custom_call.1} parent=5 // pred_check
        %p178 = pneg %p177
      $region30: #{tpu_custom_call.1} parent=5 // pred_check_branch
        %180 = sbr.rel (%p178) target = $region32
      $region31: #{tpu_custom_call.1} parent=5 // pred_region
        // Predicated region
        $region33: #{tpu_custom_call.1} parent=31 // pred_check
          %p181 = pneg %p34
        $region34: #{tpu_custom_call.1} parent=31 // pred_check_branch
          %183 = sbr.rel (%p181) target = $region36
        $region35: #{tpu_custom_call.1} parent=31 // pred_region
          %s184 = sand.u32 %s24, 1
          %s185 = scalar_lea.sflag [#allocation3], %s184
          %s186 = sand.u32 %s24, 1
          %s187 = smul.addr %s186, 64
          %s188 = scalar_lea.vmem [#allocation2], %s187
          %s189 = smul.u32 4, %s14
          %s191 = ssub.s32 1024, 1024
          %192 = vsyncadd %s185, %s191
          %s193 = smul.addr %s189, 2
          %s194 = smul.addr %s193, 128
          %s195 = scalar_lea.hbm %s0, %s194
          %s196 = sshll.u32 %s188, 4
          %s197 = int_to_ptr.vmem [resolvable:$true] %s196
          %202 = dma.hbm_to_vmem [thread:$0]  %s195, 1024, %s197, %s185, 128, 128, 8
        $region36: #{tpu_custom_call.1} parent=31 // pred_fallthru
          _
      $region32: #{tpu_custom_call.1} parent=5 // pred_fallthru
        _
      %p203 = scmp.le.s32.totalorder 1, %s14
      %p204 = scmp.lt.s32.totalorder %s14, 3
      %p205 = pnand %p203, %p204
      %p206 = pneg %p205
      // Predicated region
      $region37: #{tpu_custom_call.1} parent=5 // pred_check
        _
      $region38: #{tpu_custom_call.1} parent=5 // pred_check_branch
        %208 = sbr.rel (%p205) target = $region40
      $region39: #{tpu_custom_call.1} parent=5 // pred_region
        %s209 = ssub.s32 %s14, 1
        %s210 = sand.u32 %s27, 1
        %s211 = scalar_lea.sflag [#allocation3], %s210
        %s212 = sand.u32 %s27, 1
        %s213 = smul.addr %s212, 64
        %s214 = scalar_lea.vmem [#allocation2], %s213
        // Predicated region
        $region41: #{tpu_custom_call.1} parent=39 // pred_check
          %p215 = pneg %p40
        $region42: #{tpu_custom_call.1} parent=39 // pred_check_branch
          %217 = sbr.rel (%p215) target = $region44
        $region43: #{tpu_custom_call.1} parent=39 // pred_region
          %218 = dma.done %s211, 1024
        $region44: #{tpu_custom_call.1} parent=39 // pred_fallthru
          _
        %s219 = sand.u32 %s27, 1
        %s220 = scalar_lea.sflag [#allocation3], %s219
        %s221 = sand.u32 %s27, 1
        %s222 = smul.addr %s221, 64
        %s223 = scalar_lea.vmem [#allocation2], %s222
        %p224 = pneg %p40
        %p225 = pneg %p37
        %p226 = pneg %p61
        %p227 = pneg %p58
        %p228 = pneg %p82
        %p229 = pneg %p79
        %p230 = pneg %p103
        %p231 = pneg %p100
        %p232 = pneg %p124
        %p233 = pneg %p121
        %p234 = pneg %p150
        %p235 = pneg %p147
        %s236 = smul.u32 4, %s19
        %p237 = scmp.lt.s32.totalorder %s236, 7
        %s238 = scalar_select %p237, %s236, 7
        %s239 = smul.addr %s238, 7
        %s240 = smul.addr %s239, 8
        %s241 = scalar_lea.vmem %s5, %s240
        %s242 = smul.u32 4, %s19
        %s243 = smul.u32 4, %s19
        %p244 = scmp.lt.s32.totalorder %s243, 7
        %s245 = scalar_select %p244, %s243, 7
        %s246 = smul.addr %s245, 7
        %s247 = smul.addr %s246, 8
        %s248 = scalar_lea.vmem %s5, %s247
        %s249 = smul.u32 4, %s19
        %v251 = vld [vmem:[%s1] sm:$0xff]
        %v252 = vld [vmem:[%s1 + $0x8] sm:$0xff]
        %v253 = vld [vmem:[%s1 + $0x10] sm:$0xff]
        %v254 = vld [vmem:[%s1 + $0x18] sm:$0xff]
        %v255 = vld [vmem:[%s1 + $0x20] sm:$0xff]
        %v256 = vld [vmem:[%s1 + $0x28] sm:$0xff]
        %v257 = vld [vmem:[%s2] sm:$0xff]
        %v258 = vld [vmem:[%s2 + $0x8] sm:$0xff]
        %v259 = vld [vmem:[%s3] sm:$0xf]
        %v260 = vld [vmem:[%s3 + $0x4] sm:$0xf]
        %v261 = vld [vmem:[%s3 + $0x8] sm:$0xf]
        %v262 = vld [vmem:[%s3 + $0xc] sm:$0xf]
        %v263 = vld [vmem:[%s3 + $0x10] sm:$0xf]
        %v264 = vld [vmem:[%s3 + $0x14] sm:$0xf]
        %v265 = vld [vmem:[%s3 + $0x18] sm:$0xf]
        %v266 = vld [vmem:[%s4] sm:$0xf]
        %v267 = vld [vmem:[%s4 + $0x4] sm:$0xf]
        %v268 = vld [vmem:[%s4 + $0x8] sm:$0xf]
        %v269 = vld [vmem:[%s4 + $0xc] sm:$0xf]
        %v270 = vld [vmem:[%s4 + $0x10] sm:$0xf]
        %v271 = vld [vmem:[%s4 + $0x14] sm:$0xf]
        loop: start=0, step=1, limit=4
        $region45: #{tpu_custom_call.1} parent=39 // loop_pre_header
          _
        $region46: #{tpu_custom_call.1} parent=39 // loop_header
          %s273 = sphi 0, %s277
          %p274 = scmp.ge.s32.totalorder %s273, 4
        $region47: #{tpu_custom_call.1} parent=39 // loop_header_branch
          %276 = sbr.rel (%p274) target = $region51
        $region48: #{tpu_custom_call.1} parent=39 // loop_body
          %s278 = smul.u32 %s273, 16
          %s279 = scalar_lea.vmem %s214, %s278 [#allocation2]
          %v280 = vld [vmem:[%s279] sm:$0xff]
          %v281 = vld [vmem:[%s279 + $0x8] sm:$0xff]
          %vm282 = vcmask 130048
          %v284 = vsel %vm282, %v251, 0
          %v287 = vsel %vm282, %v252, 0
          %v290 = vsel %vm282, %v253, 0
          %v293 = vsel %vm282, %v254, 0
          %v296 = vsel %vm282, %v255, 0
          %v299 = vsel %vm282, %v256, 0
          %301 = vmatprep.subr.mxu0 0.0
          %302 = vmatpush1.msra.mxu0 %v280
          %303 = vmatprep.subr.mxu0 0.0
          %304 = vmatpush1.msra.mxu0 %v281
          %305 = vmatprep.subr.mxu0 0.0
          %306 = vmatpush1.msra.mxu0 0.0
          %307 = vmatprep.subr.mxu0 0.0
          %308 = vmatpush1.msra.mxu0 0.0
          %309 = vmatprep.subr.mxu0 0.0
          %310 = vmatpush1.msra.mxu0 0.0
          %311 = vmatprep.subr.mxu0 0.0
          %312 = vmatpush1.msra.mxu0 0.0
          %313 = vmatprep.subr.mxu0 0.0
          %314 = vmatpush1.msra.mxu0 0.0
          %315 = vmatprep.subr.mxu0 0.0
          %316 = vmatpush1.msra.mxu0 0.0
          %317 = vmatprep.subr.mxu0 0.0
          %318 = vmatpush1.msra.mxu0 0.0
          %319 = vmatprep.subr.mxu0 0.0
          %320 = vmatpush1.msra.mxu0 0.0
          %321 = vmatprep.subr.mxu0 0.0
          %322 = vmatpush1.msra.mxu0 0.0
          %323 = vmatprep.subr.mxu0 0.0
          %324 = vmatpush1.msra.mxu0 0.0
          %325 = vmatprep.subr.mxu0 0.0
          %326 = vmatpush1.msra.mxu0 0.0
          %327 = vmatprep.subr.mxu0 0.0
          %328 = vmatpush1.msra.mxu0 0.0
          %329 = vmatprep.subr.mxu0 0.0
          %330 = vmatpush1.msra.mxu0 0.0
          %331 = vmatprep.subr.mxu0 0.0
          %332 = vmatpush1.msra.mxu0 0.0
          %333 = vmatprep.subr.mxu0 0.0
          %334 = vmatpush1.msra.mxu0 0.0
          %335 = vmatprep.subr.mxu0 0.0
          %336 = vmatpush1.msra.mxu0 0.0
          %337 = vmatprep.subr.mxu0 0.0
          %338 = vmatpush1.msra.mxu0 0.0
          %339 = vmatprep.subr.mxu0 0.0
          %340 = vmatpush1.msra.mxu0 0.0
          %341 = vmatprep.subr.mxu0 0.0
          %342 = vmatpush1.msra.mxu0 0.0
          %343 = vmatprep.subr.mxu0 0.0
          %344 = vmatpush1.msra.mxu0 0.0
          %345 = vmatprep.subr.mxu0 0.0
          %346 = vmatpush1.msra.mxu0 0.0
          %347 = vmatprep.subr.mxu0 0.0
          %348 = vmatpush1.msra.mxu0 0.0
          %349 = vmatprep.subr.mxu0 0.0
          %350 = vmatpush1.msra.mxu0 0.0
          %351 = vmatprep.subr.mxu0 0.0
          %352 = vmatpush1.msra.mxu0 0.0
          %353 = vmatprep.subr.mxu0 0.0
          %354 = vmatpush1.msra.mxu0 0.0
          %355 = vmatprep.subr.mxu0 0.0
          %356 = vmatpush1.msra.mxu0 0.0
          %357 = vmatprep.subr.mxu0 0.0
          %358 = vmatpush1.msra.mxu0 0.0
          %359 = vmatprep.subr.mxu0 0.0
          %360 = vmatpush1.msra.mxu0 0.0
          %361 = vmatprep.subr.mxu0 0.0
          %362 = vmatpush1.msra.mxu0 0.0
          %363 = vmatprep.subr.mxu0 0.0
          %364 = vmatpush1.msra.mxu0 0.0
          %365 = vmatprep.mubr.f32.mxu0 0.0
          %366 = vmatmul.mubr.f32.gmra.mrb[0].mxu0 %v284
          %v367 = vpop.f32.mrb[0].mxu0
          %v368 = vadd.f32 0.0, %v367
          %v369 = vpop.f32.mrb[0].mxu0
          %370 = vmatprep.mubr.f32.mxu0 0.0
          %371 = vmatmul.mubr.f32.gmra.mrb[0].mxu0 %v287
          %v372 = vpop.f32.mrb[0].mxu0
          %v373 = vadd.f32 0.0, %v372
          %v374 = vpop.f32.mrb[0].mxu0
          %375 = vmatprep.mubr.f32.mxu0 0.0
          %376 = vmatmul.mubr.f32.gmra.mrb[0].mxu0 %v290
          %v377 = vpop.f32.mrb[0].mxu0
          %v378 = vadd.f32 0.0, %v377
          %v379 = vpop.f32.mrb[0].mxu0
          %380 = vmatprep.mubr.f32.mxu0 0.0
          %381 = vmatmul.mubr.f32.gmra.mrb[0].mxu0 %v293
          %v382 = vpop.f32.mrb[0].mxu0
          %v383 = vadd.f32 0.0, %v382
          %v384 = vpop.f32.mrb[0].mxu0
          %385 = vmatprep.mubr.f32.mxu0 0.0
          %386 = vmatmul.mubr.f32.gmra.mrb[0].mxu0 %v296
          %v387 = vpop.f32.mrb[0].mxu0
          %v388 = vadd.f32 0.0, %v387
          %v389 = vpop.f32.mrb[0].mxu0
          %390 = vmatprep.mubr.f32.mxu0 0.0
          %391 = vmatmul.mubr.f32.gmra.mrb[0].mxu0 %v299
          %v392 = vpop.f32.mrb[0].mxu0
          %v393 = vadd.f32 0.0, %v392
          %v394 = vpop.f32.mrb[0].mxu0
          %395 = vdwg.mxu0
          %v397 = vsel %vm282, %v368, 0
          %v400 = vsel %vm282, %v373, 0
          %v403 = vsel %vm282, %v378, 0
          %v406 = vsel %vm282, %v383, 0
          %v409 = vsel %vm282, %v388, 0
          %v412 = vsel %vm282, %v393, 0
          %414 = vmatprep.subr.mxu0 0.0
          %415 = vmatpush1.msra.mxu0 %v257
          %416 = vmatprep.subr.mxu0 0.0
          %417 = vmatpush1.msra.mxu0 %v258
          %418 = vmatprep.subr.mxu0 0.0
          %419 = vmatpush1.msra.mxu0 0.0
          %420 = vmatprep.subr.mxu0 0.0
          %421 = vmatpush1.msra.mxu0 0.0
          %422 = vmatprep.subr.mxu0 0.0
          %423 = vmatpush1.msra.mxu0 0.0
          %424 = vmatprep.subr.mxu0 0.0
          %425 = vmatpush1.msra.mxu0 0.0
          %426 = vmatprep.subr.mxu0 0.0
          %427 = vmatpush1.msra.mxu0 0.0
          %428 = vmatprep.subr.mxu0 0.0
          %429 = vmatpush1.msra.mxu0 0.0
          %430 = vmatprep.subr.mxu0 0.0
          %431 = vmatpush1.msra.mxu0 0.0
          %432 = vmatprep.subr.mxu0 0.0
          %433 = vmatpush1.msra.mxu0 0.0
          %434 = vmatprep.subr.mxu0 0.0
          %435 = vmatpush1.msra.mxu0 0.0
          %436 = vmatprep.subr.mxu0 0.0
          %437 = vmatpush1.msra.mxu0 0.0
          %438 = vmatprep.subr.mxu0 0.0
          %439 = vmatpush1.msra.mxu0 0.0
          %440 = vmatprep.subr.mxu0 0.0
          %441 = vmatpush1.msra.mxu0 0.0
          %442 = vmatprep.subr.mxu0 0.0
          %443 = vmatpush1.msra.mxu0 0.0
          %444 = vmatprep.subr.mxu0 0.0
          %445 = vmatpush1.msra.mxu0 0.0
          %446 = vmatprep.subr.mxu0 0.0
          %447 = vmatpush1.msra.mxu0 0.0
          %448 = vmatprep.subr.mxu0 0.0
          %449 = vmatpush1.msra.mxu0 0.0
          %450 = vmatprep.subr.mxu0 0.0
          %451 = vmatpush1.msra.mxu0 0.0
          %452 = vmatprep.subr.mxu0 0.0
          %453 = vmatpush1.msra.mxu0 0.0
          %454 = vmatprep.subr.mxu0 0.0
          %455 = vmatpush1.msra.mxu0 0.0
          %456 = vmatprep.subr.mxu0 0.0
          %457 = vmatpush1.msra.mxu0 0.0
          %458 = vmatprep.subr.mxu0 0.0
          %459 = vmatpush1.msra.mxu0 0.0
          %460 = vmatprep.subr.mxu0 0.0
          %461 = vmatpush1.msra.mxu0 0.0
          %462 = vmatprep.subr.mxu0 0.0
          %463 = vmatpush1.msra.mxu0 0.0
          %464 = vmatprep.subr.mxu0 0.0
          %465 = vmatpush1.msra.mxu0 0.0
          %466 = vmatprep.subr.mxu0 0.0
          %467 = vmatpush1.msra.mxu0 0.0
          %468 = vmatprep.subr.mxu0 0.0
          %469 = vmatpush1.msra.mxu0 0.0
          %470 = vmatprep.subr.mxu0 0.0
          %471 = vmatpush1.msra.mxu0 0.0
          %472 = vmatprep.subr.mxu0 0.0
          %473 = vmatpush1.msra.mxu0 0.0
          %474 = vmatprep.subr.mxu0 0.0
          %475 = vmatpush1.msra.mxu0 0.0
          %476 = vmatprep.subr.mxu0 0.0
          %477 = vmatpush1.msra.mxu0 0.0
          %478 = vmatprep.mubr.f32.mxu0 0.0
          %479 = vmatmul.mubr.f32.gmra.mrb[0].mxu0 %v397
          %v480 = vpop.f32.mrb[0].mxu0
          %v481 = vadd.f32 0.0, %v480
          %v482 = vpop.f32.mrb[0].mxu0
          %483 = vmatprep.mubr.f32.mxu0 0.0
          %484 = vmatmul.mubr.f32.gmra.mrb[0].mxu0 %v400
          %v485 = vpop.f32.mrb[0].mxu0
          %v486 = vadd.f32 0.0, %v485
          %v487 = vpop.f32.mrb[0].mxu0
          %488 = vmatprep.mubr.f32.mxu0 0.0
          %489 = vmatmul.mubr.f32.gmra.mrb[0].mxu0 %v403
          %v490 = vpop.f32.mrb[0].mxu0
          %v491 = vadd.f32 0.0, %v490
          %v492 = vpop.f32.mrb[0].mxu0
          %493 = vmatprep.mubr.f32.mxu0 0.0
          %494 = vmatmul.mubr.f32.gmra.mrb[0].mxu0 %v406
          %v495 = vpop.f32.mrb[0].mxu0
          %v496 = vadd.f32 0.0, %v495
          %v497 = vpop.f32.mrb[0].mxu0
          %498 = vmatprep.mubr.f32.mxu0 0.0
          %499 = vmatmul.mubr.f32.gmra.mrb[0].mxu0 %v409
          %v500 = vpop.f32.mrb[0].mxu0
          %v501 = vadd.f32 0.0, %v500
          %v502 = vpop.f32.mrb[0].mxu0
          %503 = vmatprep.mubr.f32.mxu0 0.0
          %504 = vmatmul.mubr.f32.gmra.mrb[0].mxu0 %v412
          %v505 = vpop.f32.mrb[0].mxu0
          %v506 = vadd.f32 0.0, %v505
          %v507 = vpop.f32.mrb[0].mxu0
          %508 = vdwg.mxu0
          %vm509 = vcmp.gt.f32.partialorder %v481, 0.0
          %vm510 = vcmp.gt.f32.partialorder %v486, 0.0
          %vm511 = vcmp.gt.f32.partialorder %v491, 0.0
          %vm512 = vcmp.gt.f32.partialorder %v496, 0.0
          %vm513 = vcmp.gt.f32.partialorder %v501, 0.0
          %vm514 = vcmp.gt.f32.partialorder %v506, 0.0
          %v515 = vsel %vm509, 1.0, 0.0
          %v516 = vsel %vm510, 1.0, 0.0
          %v517 = vsel %vm511, 1.0, 0.0
          %v518 = vsel %vm512, 1.0, 0.0
          %v519 = vsel %vm513, 1.0, 0.0
          %v520 = vsel %vm514, 1.0, 0.0
          %v521 = vpack.c.bf16 %v516, %v515
          %v522 = vpack.c.bf16 %v518, %v517
          %v523 = vpack.c.bf16 %v520, %v519
          %v531 = vunpack.c.l.b16 %v259
          %v532 = vunpack.c.l.b16 %v260
          %v533 = vunpack.c.l.b16 %v261
          %v534 = vunpack.c.l.b16 %v262
          %v535 = vunpack.c.l.b16 %v263
          %v536 = vunpack.c.l.b16 %v264
          %v537 = vunpack.c.l.b16 %v265
          %v538 = vpack.c.b16 %v532, %v531
          %v539 = vpack.c.b16 %v534, %v533
          %v540 = vpack.c.b16 %v536, %v535
          %v541 = vpack.c.b16 %v537, %v537
          %vm542 = vcmask 392192
          %v544 = vsel %vm542, %v538, 0
          %v547 = vsel %vm542, %v539, 0
          %v550 = vsel %vm542, %v540, 0
          %v553 = vsel %vm542, %v541, 0
          %555 = vmatprep.subr.bf16.mxu0 0
          %556 = vmatpush1.bf16.msra.mxu0 %v521
          %557 = vmatprep.subr.bf16.mxu0 0
          %558 = vmatpush1.bf16.msra.mxu0 %v522
          %559 = vmatprep.subr.bf16.mxu0 0
          %560 = vmatpush1.bf16.msra.mxu0 %v523
          %561 = vmatprep.subr.bf16.mxu0 0
          %562 = vmatpush1.bf16.msra.mxu0 0
          %563 = vmatprep.subr.bf16.mxu0 0
          %564 = vmatpush1.bf16.msra.mxu0 0
          %565 = vmatprep.subr.bf16.mxu0 0
          %566 = vmatpush1.bf16.msra.mxu0 0
          %567 = vmatprep.subr.bf16.mxu0 0
          %568 = vmatpush1.bf16.msra.mxu0 0
          %569 = vmatprep.subr.bf16.mxu0 0
          %570 = vmatpush1.bf16.msra.mxu0 0
          %571 = vmatprep.subr.bf16.mxu0 0
          %572 = vmatpush1.bf16.msra.mxu0 0
          %573 = vmatprep.subr.bf16.mxu0 0
          %574 = vmatpush1.bf16.msra.mxu0 0
          %575 = vmatprep.subr.bf16.mxu0 0
          %576 = vmatpush1.bf16.msra.mxu0 0
          %577 = vmatprep.subr.bf16.mxu0 0
          %578 = vmatpush1.bf16.msra.mxu0 0
          %579 = vmatprep.subr.bf16.mxu0 0
          %580 = vmatpush1.bf16.msra.mxu0 0
          %581 = vmatprep.subr.bf16.mxu0 0
          %582 = vmatpush1.bf16.msra.mxu0 0
          %583 = vmatprep.subr.bf16.mxu0 0
          %584 = vmatpush1.bf16.msra.mxu0 0
          %585 = vmatprep.subr.bf16.mxu0 0
          %586 = vmatpush1.bf16.msra.mxu0 0
          %587 = vmatprep.mubr.bf16.mxu0 0
          %588 = vmatmul.mubr.bf16.gmra.mrb[0].mxu0 %v544
          %v589 = vpop.f32.mrb[0].mxu0
          %v590 = vadd.f32 0.0, %v589
          %v591 = vpop.f32.mrb[0].mxu0
          %v592 = vpop.f32.mrb[0].mxu0
          %v593 = vadd.f32 0.0, %v592
          %v594 = vpop.f32.mrb[0].mxu0
          %595 = vmatprep.mubr.bf16.mxu0 0
          %596 = vmatmul.mubr.bf16.gmra.mrb[0].mxu0 %v547
          %v597 = vpop.f32.mrb[0].mxu0
          %v598 = vadd.f32 0.0, %v597
          %v599 = vpop.f32.mrb[0].mxu0
          %v600 = vpop.f32.mrb[0].mxu0
          %v601 = vadd.f32 0.0, %v600
          %v602 = vpop.f32.mrb[0].mxu0
          %603 = vmatprep.mubr.bf16.mxu0 0
          %604 = vmatmul.mubr.bf16.gmra.mrb[0].mxu0 %v550
          %v605 = vpop.f32.mrb[0].mxu0
          %v606 = vadd.f32 0.0, %v605
          %v607 = vpop.f32.mrb[0].mxu0
          %v608 = vpop.f32.mrb[0].mxu0
          %v609 = vadd.f32 0.0, %v608
          %v610 = vpop.f32.mrb[0].mxu0
          %611 = vmatprep.mubr.bf16.mxu0 0
          %612 = vmatmul.mubr.bf16.gmra.mrb[0].mxu0 %v553
          %v613 = vpop.f32.mrb[0].mxu0
          %v614 = vadd.f32 0.0, %v613
          %v615 = vpop.f32.mrb[0].mxu0
          %v616 = vpop.f32.mrb[0].mxu0
          %v617 = vpop.f32.mrb[0].mxu0
          %618 = vdwg.mxu0
          %v619 = vpack.c.bf16 %v593, %v590
          %v620 = vpack.c.bf16 %v601, %v598
          %v621 = vpack.c.bf16 %v609, %v606
          %v622 = vpack.c.bf16 %v614, %v614
          %v629 = vunpack.c.l.b16 %v266
          %v630 = vunpack.c.l.b16 %v267
          %v631 = vunpack.c.l.b16 %v268
          %v632 = vunpack.c.l.b16 %v269
          %v633 = vunpack.c.l.b16 %v270
          %v634 = vunpack.c.l.b16 %v271
          %v635 = vpack.c.b16 %v630, %v629
          %v636 = vpack.c.b16 %v632, %v631
          %v637 = vpack.c.b16 %v634, %v633
          %v642 = vsel %vm542, %v619, 0
          %v645 = vsel %vm542, %v620, 0
          %v648 = vsel %vm542, %v621, 0
          %v651 = vsel %vm542, %v622, 0
          %653 = vmatprep.subr.bf16.mxu0 0
          %654 = vmatpush1.bf16.msra.mxu0 %v635
          %655 = vmatprep.subr.bf16.mxu0 0
          %656 = vmatpush1.bf16.msra.mxu0 %v636
          %657 = vmatprep.subr.bf16.mxu0 0
          %658 = vmatpush1.bf16.msra.mxu0 %v637
          %659 = vmatprep.subr.bf16.mxu0 0
          %660 = vmatpush1.bf16.msra.mxu0 0
          %661 = vmatprep.subr.bf16.mxu0 0
          %662 = vmatpush1.bf16.msra.mxu0 0
          %663 = vmatprep.subr.bf16.mxu0 0
          %664 = vmatpush1.bf16.msra.mxu0 0
          %665 = vmatprep.subr.bf16.mxu0 0
          %666 = vmatpush1.bf16.msra.mxu0 0
          %667 = vmatprep.subr.bf16.mxu0 0
          %668 = vmatpush1.bf16.msra.mxu0 0
          %669 = vmatprep.subr.bf16.mxu0 0
          %670 = vmatpush1.bf16.msra.mxu0 0
          %671 = vmatprep.subr.bf16.mxu0 0
          %672 = vmatpush1.bf16.msra.mxu0 0
          %673 = vmatprep.subr.bf16.mxu0 0
          %674 = vmatpush1.bf16.msra.mxu0 0
          %675 = vmatprep.subr.bf16.mxu0 0
          %676 = vmatpush1.bf16.msra.mxu0 0
          %677 = vmatprep.subr.bf16.mxu0 0
          %678 = vmatpush1.bf16.msra.mxu0 0
          %679 = vmatprep.subr.bf16.mxu0 0
          %680 = vmatpush1.bf16.msra.mxu0 0
          %681 = vmatprep.subr.bf16.mxu0 0
          %682 = vmatpush1.bf16.msra.mxu0 0
          %683 = vmatprep.subr.bf16.mxu0 0
          %684 = vmatpush1.bf16.msra.mxu0 0
          %685 = vmatprep.mubr.bf16.mxu0 0
          %686 = vmatmul.mubr.bf16.gmra.mrb[0].mxu0 %v642
          %v687 = vpop.f32.mrb[0].mxu0
          %v688 = vadd.f32 0.0, %v687
          %v689 = vpop.f32.mrb[0].mxu0
          %v690 = vpop.f32.mrb[0].mxu0
          %v691 = vadd.f32 0.0, %v690
          %v692 = vpop.f32.mrb[0].mxu0
          %693 = vmatprep.mubr.bf16.mxu0 0
          %694 = vmatmul.mubr.bf16.gmra.mrb[0].mxu0 %v645
          %v695 = vpop.f32.mrb[0].mxu0
          %v696 = vadd.f32 0.0, %v695
          %v697 = vpop.f32.mrb[0].mxu0
          %v698 = vpop.f32.mrb[0].mxu0
          %v699 = vadd.f32 0.0, %v698
          %v700 = vpop.f32.mrb[0].mxu0
          %701 = vmatprep.mubr.bf16.mxu0 0
          %702 = vmatmul.mubr.bf16.gmra.mrb[0].mxu0 %v648
          %v703 = vpop.f32.mrb[0].mxu0
          %v704 = vadd.f32 0.0, %v703
          %v705 = vpop.f32.mrb[0].mxu0
          %v706 = vpop.f32.mrb[0].mxu0
          %v707 = vadd.f32 0.0, %v706
          %v708 = vpop.f32.mrb[0].mxu0
          %709 = vmatprep.mubr.bf16.mxu0 0
          %710 = vmatmul.mubr.bf16.gmra.mrb[0].mxu0 %v651
          %v711 = vpop.f32.mrb[0].mxu0
          %v712 = vadd.f32 0.0, %v711
          %v713 = vpop.f32.mrb[0].mxu0
          %v714 = vpop.f32.mrb[0].mxu0
          %v715 = vpop.f32.mrb[0].mxu0
          %716 = vdwg.mxu0
          %s717 = smul.u32 %s273, 56
          %s718 = scalar_lea.vmem %s248, %s717
          %vm719 = vcmask 359424
          %720 = vst.msk [vmem:[%s718] sm:$0xff] %vm719, %v688
          %721 = vst.msk [vmem:[%s718 + $0x8] sm:$0xff] %vm719, %v691
          %722 = vst.msk [vmem:[%s718 + $0x10] sm:$0xff] %vm719, %v696
          %723 = vst.msk [vmem:[%s718 + $0x18] sm:$0xff] %vm719, %v699
          %724 = vst.msk [vmem:[%s718 + $0x20] sm:$0xff] %vm719, %v704
          %725 = vst.msk [vmem:[%s718 + $0x28] sm:$0xff] %vm719, %v707
          %726 = vst.msk [vmem:[%s718 + $0x30] sm:$0xff] %vm719, %v712
        $region49: #{tpu_custom_call.1} parent=39 // loop_footer
          %s277 = sadd.s32 1, %s273
        $region50: #{tpu_custom_call.1} parent=39 // loop_footer_branch
          %272 = sbr.rel target = $region46
        $region51: #{tpu_custom_call.1} parent=39 // loop_exit
          _
        %s727 = smul.u32 4, %s19
        %p728 = scmp.lt.s32.totalorder %s727, 7
        %s729 = scalar_select %p728, %s727, 7
        %s730 = smul.addr %s729, 7
        %s731 = smul.addr %s730, 8
        %s732 = scalar_lea.vmem %s5, %s731
        // Predicated region
        $region52: #{tpu_custom_call.1} parent=39 // pred_check
          %p733 = pneg %p147
        $region53: #{tpu_custom_call.1} parent=39 // pred_check_branch
          %735 = sbr.rel (%p733) target = $region55
        $region54: #{tpu_custom_call.1} parent=39 // pred_region
          %s736 = smul.u32 4, %s19
        $region55: #{tpu_custom_call.1} parent=39 // pred_fallthru
          _
      $region40: #{tpu_custom_call.1} parent=5 // pred_fallthru
        _
      %p737 = scmp.le.s32.totalorder 2, %s14
      // Predicated region
      $region56: #{tpu_custom_call.1} parent=5 // pred_check
        %p738 = pneg %p737
      $region57: #{tpu_custom_call.1} parent=5 // pred_check_branch
        %740 = sbr.rel (%p738) target = $region59
      $region58: #{tpu_custom_call.1} parent=5 // pred_region
        %s741 = ssub.s32 %s14, 2
        // Predicated region
        $region60: #{tpu_custom_call.1} parent=58 // pred_check
          %p742 = pneg %p153
        $region61: #{tpu_custom_call.1} parent=58 // pred_check_branch
          %744 = sbr.rel (%p742) target = $region63
        $region62: #{tpu_custom_call.1} parent=58 // pred_region
          %s745 = smul.u32 4, %s20
          %p746 = scmp.lt.s32.totalorder %s745, 7
          %s747 = scalar_select %p746, %s745, 7
          %s748 = smul.addr %s747, 7
          %s749 = smul.addr %s748, 8
          %s750 = scalar_lea.vmem %s5, %s749
        $region63: #{tpu_custom_call.1} parent=58 // pred_fallthru
          _
      $region59: #{tpu_custom_call.1} parent=5 // pred_fallthru
        _
    $region6: #{tpu_custom_call.1} parent=1 // loop_footer
      %s18 = sadd.s32 1, %s14
    $region7: #{tpu_custom_call.1} parent=1 // loop_footer_branch
      %13 = sbr.rel target = $region3
    $region8: #{tpu_custom_call.1} parent=1 // loop_exit
      _
    %751 = vsyncpa [#allocation3], 1
    %s752 = scalar_lea.sflag [#allocation3], 1
    %753 = vsyncpa %s752, 1

</llo_original>
